<compile_context>
chip_gen: v5e
topology: v5e:2x2
jax: 0.10.0
libtpu: 0.0.40
codegen_flags: <defaults>
</compile_context>

<pallas_src>
import jax
import jax.numpy as jnp
from jax.experimental import pallas as pl
from jax.experimental.pallas import tpu as pltpu


def fc_classifier_kernel(x_ref, w1_ref, b1_ref, w2_ref, b2_ref, w3_ref, b3_ref,
                         o_ref):
    # Layer 1: Linear(nz -> nh) on the MXU (bf16 in, f32 acc) + LeakyReLU(0.01).
    x = x_ref[...]                                     # bf16; no upcast pre-MXU
    h1 = jnp.dot(x, w1_ref[...], preferred_element_type=jnp.float32) + b1_ref[...]
    h1 = jnp.where(h1 > 0, h1, 0.01 * h1)

    # Layer 2: Linear(nh -> 2nh) + LeakyReLU(0.01).
    h2 = jnp.dot(h1.astype(jnp.bfloat16), w2_ref[...],
                 preferred_element_type=jnp.float32) + b2_ref[...]
    h2 = jnp.where(h2 > 0, h2, 0.01 * h2)

    # Layer 3: Linear(2nh -> n_out). The N=1 matmul is a single tiny MXU op;
    # the output stays (bm, n_out) — no lane padding.
    h3 = jnp.dot(h2.astype(jnp.bfloat16), w3_ref[...],
                 preferred_element_type=jnp.float32) + b3_ref[...]

    # Sigmoid: exp goes to the EUP; approximate reciprocal also rides the EUP
    # slot, keeping the VALU free in the epilogue.
    o_ref[...] = pl.reciprocal(1.0 + jnp.exp(-h3), approx=True).astype(o_ref.dtype)


def _round_up(x, m):
    return ((x + m - 1) // m) * m


def _choose_block_batch(batch, block_batch):
    """Pick the batch tile: big tiles amortize per-step overhead (~600 cyc)."""
    if block_batch is not None:
        return _round_up(max(1, min(block_batch, batch)), 8)
    b8 = _round_up(batch, 8)
    bm = min(1024, b8)   # 1024-row tiles: ~85% of HBM roofline vs ~29% at tiny tiles
    # v7x has 2 TensorCores; keep the "parallel" batch axis at >=2 grid steps
    # once the batch is big enough for the split to matter.
    if b8 >= 256 and b8 // bm < 2:
        bm = _round_up((b8 + 1) // 2, 8)
    return bm


def fc_classifier_forward(x, params, *, block_batch=None):
    """x: (B, nz). params: weights stored transposed (in, out) + biases (1, out)."""
    B, nz = x.shape
    # bf16 feeds for the MXU; biases stay f32 (added onto the f32 accumulator).
    x_bf = x.astype(jnp.bfloat16)
    w1 = params["w1"].astype(jnp.bfloat16)
    w2 = params["w2"].astype(jnp.bfloat16)
    w3 = params["w3"].astype(jnp.bfloat16)
    b1 = params["b1"].astype(jnp.float32)
    b2 = params["b2"].astype(jnp.float32)
    b3 = params["b3"].astype(jnp.float32)
    n_out = w3.shape[1]

    bm = _choose_block_batch(B, block_batch)
    Bp = _round_up(B, bm)
    if Bp != B:
        x_bf = jnp.pad(x_bf, ((0, Bp - B), (0, 0)))   # zero-pad tail rows
    grid = (Bp // bm,)

    # Tiny weights/biases are made VMEM-resident once (no per-step
    # double-buffering / DMA descriptor churn across grid iterations).
    resident = pl.BlockSpec(memory_space=pltpu.MemorySpace.VMEM)

    out = pl.pallas_call(
        fc_classifier_kernel,
        out_shape=jax.ShapeDtypeStruct((Bp, n_out), jnp.float32),
        grid_spec=pltpu.PrefetchScalarGridSpec(
            num_scalar_prefetch=0,
            grid=grid,
            in_specs=[
                pl.BlockSpec((bm, nz), lambda i: (i, 0)),  # x tile (pipelined)
                resident, resident,                        # w1, b1
                resident, resident,                        # w2, b2
                resident, resident,                        # w3, b3
            ],
            out_specs=pl.BlockSpec((bm, n_out), lambda i: (i, 0)),
        ),
        compiler_params=pltpu.CompilerParams(
            dimension_semantics=("parallel",)),
    )(x_bf, w1, b1, w2, b2, w3, b3)

    return out[:B] if Bp != B else out


def init_params(key, nz, n_hidden=50, n_out=1, dtype=jnp.float32):
    """nn.Linear-style init U(-1/sqrt(fan_in), 1/sqrt(fan_in)); weights stored
    already transposed as (in_features, out_features)."""
    ks = jax.random.split(key, 6)

    def linear(kw, kb, fan_in, fan_out):
        bound = 1.0 / jnp.sqrt(fan_in)
        w = jax.random.uniform(kw, (fan_in, fan_out), dtype, -bound, bound)
        b = jax.random.uniform(kb, (1, fan_out), dtype, -bound, bound)
        return w, b

    w1, b1 = linear(ks[0], ks[1], nz, n_hidden)
    w2, b2 = linear(ks[2], ks[3], n_hidden, 2 * n_hidden)
    w3, b3 = linear(ks[4], ks[5], 2 * n_hidden, n_out)
    return {"w1": w1, "b1": b1, "w2": w2, "b2": b2, "w3": w3, "b3": b3}


def fc_classifier_ref_mixed(x, p):
    """Pure-JAX reference mirroring the kernel's precision (bf16 MXU inputs,
    f32 accumulation) — tight tolerance check."""
    bf = jnp.bfloat16
    h = jnp.dot(x.astype(bf), p["w1"].astype(bf),
                preferred_element_type=jnp.float32) + p["b1"]
    h = jnp.where(h > 0, h, 0.01 * h)
    h = jnp.dot(h.astype(bf), p["w2"].astype(bf),
                preferred_element_type=jnp.float32) + p["b2"]
    h = jnp.where(h > 0, h, 0.01 * h)
    h = jnp.dot(h.astype(bf), p["w3"].astype(bf),
                preferred_element_type=jnp.float32) + p["b3"]
    return jax.nn.sigmoid(h)


def fc_classifier_ref_f32(x, p):
    """Full-f32 reference matching the PyTorch module's numerics."""
    h = x @ p["w1"] + p["b1"]
    h = jnp.where(h > 0, h, 0.01 * h)
    h = h @ p["w2"] + p["b2"]
    h = jnp.where(h > 0, h, 0.01 * h)
    h = h @ p["w3"] + p["b3"]
    return jax.nn.sigmoid(h)


if __name__ == "__main__":
    nz, n_hidden, n_out = 32, 50, 1

    key = jax.random.PRNGKey(0)
    kx, kp = jax.random.split(key)
    params = init_params(kp, nz, n_hidden, n_out)

    # Batch 16 (tile-aligned) and 19 (exercises the padded-tail path).
    for batch in (16, 19):
        x = jax.random.normal(jax.random.fold_in(kx, batch), (batch, nz),
                              jnp.float32)
        out = jax.block_until_ready(fc_classifier_forward(x, params))
        assert out.shape == (batch, n_out)

        ref_mixed = fc_classifier_ref_mixed(x, params)
        ref_f32 = fc_classifier_ref_f32(x, params)
        err_mixed = float(jnp.max(jnp.abs(out - ref_mixed)))
        err_f32 = float(jnp.max(jnp.abs(out - ref_f32)))
        # Sigmoid outputs live in (0,1): tight check vs the precision-matched
        # reference, looser sanity check vs the pure-f32 (PyTorch) reference.
        assert err_mixed < 1e-2, f"mixed-precision ref mismatch: {err_mixed}"
        assert err_f32 < 5e-2, f"f32 ref mismatch: {err_f32}"

    print("KERNEL_OK")
</pallas_src>

<mosaic_0001>
module attributes {stable_mosaic.version = 11 : i64} {
  func.func @fc_classifier_kernel(%arg0: i32, %arg1: memref<16x32xbf16, #tpu.memory_space<vmem>>, %arg2: memref<32x50xbf16, #tpu.memory_space<vmem>>, %arg3: memref<1x50xf32, #tpu.memory_space<vmem>>, %arg4: memref<50x100xbf16, #tpu.memory_space<vmem>>, %arg5: memref<1x100xf32, #tpu.memory_space<vmem>>, %arg6: memref<100x1xbf16, #tpu.memory_space<vmem>>, %arg7: memref<1x1xf32, #tpu.memory_space<vmem>>, %arg8: memref<16x1xf32, #tpu.memory_space<vmem>>) attributes {dimension_semantics = [#tpu.dimension_semantics<parallel>], iteration_bounds = array<i64: 1>, scalar_prefetch = 0 : i64, scratch_operands = 0 : i64, tpu.core_type = #tpu.core_type<tc>, window_params = [{transform_indices = @transform_0, window_bounds = array<i64: 16, 32>}, {pipeline_mode = #tpu.pipeline_mode<synchronous>, transform_indices = @transform_1, window_bounds = array<i64: 32, 50>}, {pipeline_mode = #tpu.pipeline_mode<synchronous>, transform_indices = @transform_2, window_bounds = array<i64: 1, 50>}, {pipeline_mode = #tpu.pipeline_mode<synchronous>, transform_indices = @transform_3, window_bounds = array<i64: 50, 100>}, {pipeline_mode = #tpu.pipeline_mode<synchronous>, transform_indices = @transform_4, window_bounds = array<i64: 1, 100>}, {pipeline_mode = #tpu.pipeline_mode<synchronous>, transform_indices = @transform_5, window_bounds = array<i64: 100, 1>}, {pipeline_mode = #tpu.pipeline_mode<synchronous>, transform_indices = @transform_6, window_bounds = array<i64: 1, 1>}, {transform_indices = @transform_7, window_bounds = array<i64: 16, 1>}]} {
    %c0 = arith.constant 0 : index
    %c0_0 = arith.constant 0 : index
    %0 = vector.load %arg1[%c0, %c0_0] : memref<16x32xbf16, #tpu.memory_space<vmem>>, vector<16x32xbf16>
    %c0_1 = arith.constant 0 : index
    %c0_2 = arith.constant 0 : index
    %1 = vector.load %arg2[%c0_1, %c0_2] : memref<32x50xbf16, #tpu.memory_space<vmem>>, vector<32x50xbf16>
    %cst = arith.constant dense<0.000000e+00> : vector<16x50xf32>
    %2 = tpu.matmul %0, %1, %cst {dimension_numbers = #tpu.dot_dimension_numbers<[1], [0], [0], [1], [0, 0, 1, 1], [], []>} : vector<16x32xbf16>, vector<32x50xbf16>, vector<16x50xf32> -> vector<16x50xf32>
    %c0_3 = arith.constant 0 : index
    %c0_4 = arith.constant 0 : index
    %3 = vector.load %arg3[%c0_3, %c0_4] : memref<1x50xf32, #tpu.memory_space<vmem>>, vector<1x50xf32>
    %4 = vector.broadcast %3 : vector<1x50xf32> to vector<16x50xf32>
    %5 = arith.addf %2, %4 : vector<16x50xf32>
    %cst_5 = arith.constant 0.000000e+00 : f32
    %6 = vector.broadcast %cst_5 : f32 to vector<16x50xf32>
    %7 = arith.cmpf ogt, %5, %6 : vector<16x50xf32>
    %cst_6 = arith.constant 0.00999999977 : f32
    %8 = vector.broadcast %cst_6 : f32 to vector<16x50xf32>
    %9 = arith.mulf %8, %5 : vector<16x50xf32>
    %10 = arith.select %7, %5, %9 : vector<16x50xi1>, vector<16x50xf32>
    %11 = arith.truncf %10 : vector<16x50xf32> to vector<16x50xbf16>
    %c0_7 = arith.constant 0 : index
    %c0_8 = arith.constant 0 : index
    %12 = vector.load %arg4[%c0_7, %c0_8] : memref<50x100xbf16, #tpu.memory_space<vmem>>, vector<50x100xbf16>
    %cst_9 = arith.constant dense<0.000000e+00> : vector<16x100xf32>
    %13 = tpu.matmul %11, %12, %cst_9 {dimension_numbers = #tpu.dot_dimension_numbers<[1], [0], [0], [1], [0, 0, 1, 1], [], []>} : vector<16x50xbf16>, vector<50x100xbf16>, vector<16x100xf32> -> vector<16x100xf32>
    %c0_10 = arith.constant 0 : index
    %c0_11 = arith.constant 0 : index
    %14 = vector.load %arg5[%c0_10, %c0_11] : memref<1x100xf32, #tpu.memory_space<vmem>>, vector<1x100xf32>
    %15 = vector.broadcast %14 : vector<1x100xf32> to vector<16x100xf32>
    %16 = arith.addf %13, %15 : vector<16x100xf32>
    %cst_12 = arith.constant 0.000000e+00 : f32
    %17 = vector.broadcast %cst_12 : f32 to vector<16x100xf32>
    %18 = arith.cmpf ogt, %16, %17 : vector<16x100xf32>
    %cst_13 = arith.constant 0.00999999977 : f32
    %19 = vector.broadcast %cst_13 : f32 to vector<16x100xf32>
    %20 = arith.mulf %19, %16 : vector<16x100xf32>
    %21 = arith.select %18, %16, %20 : vector<16x100xi1>, vector<16x100xf32>
    %22 = arith.truncf %21 : vector<16x100xf32> to vector<16x100xbf16>
    %c0_14 = arith.constant 0 : index
    %c0_15 = arith.constant 0 : index
    %23 = vector.load %arg6[%c0_14, %c0_15] : memref<100x1xbf16, #tpu.memory_space<vmem>>, vector<100x1xbf16>
    %cst_16 = arith.constant dense<0.000000e+00> : vector<16x1xf32>
    %24 = tpu.matmul %22, %23, %cst_16 {dimension_numbers = #tpu.dot_dimension_numbers<[1], [0], [0], [1], [0, 0, 1, 1], [], []>} : vector<16x100xbf16>, vector<100x1xbf16>, vector<16x1xf32> -> vector<16x1xf32>
    %c0_17 = arith.constant 0 : index
    %c0_18 = arith.constant 0 : index
    %25 = vector.load %arg7[%c0_17, %c0_18] : memref<1x1xf32, #tpu.memory_space<vmem>>, vector<1x1xf32>
    %26 = vector.broadcast %25 : vector<1x1xf32> to vector<16x1xf32>
    %27 = arith.addf %24, %26 : vector<16x1xf32>
    %cst_19 = arith.constant 0.000000e+00 : f32
    %28 = vector.broadcast %cst_19 : f32 to vector<16x1xf32>
    %29 = arith.subf %28, %27 : vector<16x1xf32>
    %30 = math.exp %29 : vector<16x1xf32>
    %cst_20 = arith.constant 1.000000e+00 : f32
    %31 = vector.broadcast %cst_20 : f32 to vector<16x1xf32>
    %32 = arith.addf %31, %30 : vector<16x1xf32>
    %33 = tpu.reciprocal %32 {approx = true} : vector<16x1xf32> -> vector<16x1xf32>
    %c0_21 = arith.constant 0 : index
    %c0_22 = arith.constant 0 : index
    %34 = vector.load %arg8[%c0_21, %c0_22] : memref<16x1xf32, #tpu.memory_space<vmem>>, vector<16x1xf32>
    tpu.vector_store %arg8[%c0_21, %c0_22], %33 {strides = array<i32>} : memref<16x1xf32, #tpu.memory_space<vmem>>, vector<16x1xf32>,
    return
  }
  func.func @transform_0(%arg0: i32) -> (i32, i32) {
    %c0_i32 = arith.constant 0 : i32
    %c0_i32_0 = arith.constant 0 : i32
    return %arg0, %c0_i32 : i32, i32
  }
  func.func @transform_1(%arg0: i32) -> (i32, i32) {
    %c0_i32 = arith.constant 0 : i32
    %c0_i32_0 = arith.constant 0 : i32
    %c0_i32_1 = arith.constant 0 : i32
    return %c0_i32, %c0_i32_0 : i32, i32
  }
  func.func @transform_2(%arg0: i32) -> (i32, i32) {
    %c0_i32 = arith.constant 0 : i32
    %c0_i32_0 = arith.constant 0 : i32
    %c0_i32_1 = arith.constant 0 : i32
    return %c0_i32, %c0_i32_0 : i32, i32
  }
  func.func @transform_3(%arg0: i32) -> (i32, i32) {
    %c0_i32 = arith.constant 0 : i32
    %c0_i32_0 = arith.constant 0 : i32
    %c0_i32_1 = arith.constant 0 : i32
    return %c0_i32, %c0_i32_0 : i32, i32
  }
  func.func @transform_4(%arg0: i32) -> (i32, i32) {
    %c0_i32 = arith.constant 0 : i32
    %c0_i32_0 = arith.constant 0 : i32
    %c0_i32_1 = arith.constant 0 : i32
    return %c0_i32, %c0_i32_0 : i32, i32
  }
  func.func @transform_5(%arg0: i32) -> (i32, i32) {
    %c0_i32 = arith.constant 0 : i32
    %c0_i32_0 = arith.constant 0 : i32
    %c0_i32_1 = arith.constant 0 : i32
    return %c0_i32, %c0_i32_0 : i32, i32
  }
  func.func @transform_6(%arg0: i32) -> (i32, i32) {
    %c0_i32 = arith.constant 0 : i32
    %c0_i32_0 = arith.constant 0 : i32
    %c0_i32_1 = arith.constant 0 : i32
    return %c0_i32, %c0_i32_0 : i32, i32
  }
  func.func @transform_7(%arg0: i32) -> (i32, i32) {
    %c0_i32 = arith.constant 0 : i32
    %c0_i32_0 = arith.constant 0 : i32
    return %arg0, %c0_i32 : i32, i32
  }
}

</mosaic_0001>

<llo_original>
// kernel: tpu_custom_call.1
$region0: #{tpu_custom_call.1}
  #allocation0 [shape = 'u32[]', space=smem, size = 0x4, offset = 0x4, fixed_abs, tag = 'smem constant byte address 0x4 - core index']
  #allocation1 [shape = 'u32[72,128]{1,0:T(1,128)}', space=vmem, size = 0x9000, scoped, tag = 'internal scratch']
  #allocation2 [shape = 'f32[1,1]{1,0:T(1,128)S(1)}', space=vmem, size = 0x200, scoped, tag = 'scoped memory for tpu_custom_call.1']
  %s0 = inlined_call_operand.vmem [shape: bf16[16,32], index: 0, kind: input, shape index: {}]
  %s1 = inlined_call_operand.vmem [shape: bf16[32,50], index: 1, kind: input, shape index: {}]
  %s2 = inlined_call_operand.vmem [shape: f32[1,50], index: 2, kind: input, shape index: {}]
  %s3 = inlined_call_operand.vmem [shape: bf16[50,100], index: 3, kind: input, shape index: {}]
  %s4 = inlined_call_operand.vmem [shape: f32[1,100], index: 4, kind: input, shape index: {}]
  %s5 = inlined_call_operand.vmem [shape: bf16[100,1], index: 5, kind: input, shape index: {}]
  %s6 = inlined_call_operand.<no memory space> [shape: f32[1,1], index: 6, kind: input, shape index: {}]
  %s7 = inlined_call_operand.vmem [shape: f32[16,1], index: 7, kind: output, shape index: {}]
  %s8 = sld [smem:[#allocation0]]
  $region38: #{tpu_custom_call.1} parent=0
    _
  %s10 = ssub.s32 1, %s8
  %s11 = scalar_select 0, %s10, %s8
  %v12 = vstv %s6
  %13 = vst [vmem:[#allocation2] sm:$0x1] %v12
  // Predicated region
  $region2: #{tpu_custom_call.1} parent=0 // pred_check
    _
  $region3: #{tpu_custom_call.1} parent=0 // pred_check_branch
    %15 = sbr.rel (0) target = $region5
  $region4: #{tpu_custom_call.1} parent=0 // pred_region
    _
  $region5: #{tpu_custom_call.1} parent=0 // pred_fallthru
    _
  // Predicated region
  $region6: #{tpu_custom_call.1} parent=0 // pred_check
    _
  $region7: #{tpu_custom_call.1} parent=0 // pred_check_branch
    %17 = sbr.rel (0) target = $region9
  $region8: #{tpu_custom_call.1} parent=0 // pred_region
    _
  $region9: #{tpu_custom_call.1} parent=0 // pred_fallthru
    _
  // Predicated region
  $region10: #{tpu_custom_call.1} parent=0 // pred_check
    _
  $region11: #{tpu_custom_call.1} parent=0 // pred_check_branch
    %19 = sbr.rel (0) target = $region13
  $region12: #{tpu_custom_call.1} parent=0 // pred_region
    _
  $region13: #{tpu_custom_call.1} parent=0 // pred_fallthru
    _
  // Predicated region
  $region14: #{tpu_custom_call.1} parent=0 // pred_check
    _
  $region15: #{tpu_custom_call.1} parent=0 // pred_check_branch
    %21 = sbr.rel (0) target = $region17
  $region16: #{tpu_custom_call.1} parent=0 // pred_region
    _
  $region17: #{tpu_custom_call.1} parent=0 // pred_fallthru
    _
  // Predicated region
  $region18: #{tpu_custom_call.1} parent=0 // pred_check
    _
  $region19: #{tpu_custom_call.1} parent=0 // pred_check_branch
    %23 = sbr.rel (0) target = $region21
  $region20: #{tpu_custom_call.1} parent=0 // pred_region
    _
  $region21: #{tpu_custom_call.1} parent=0 // pred_fallthru
    _
  // Predicated region
  $region22: #{tpu_custom_call.1} parent=0 // pred_check
    _
  $region23: #{tpu_custom_call.1} parent=0 // pred_check_branch
    %25 = sbr.rel (0) target = $region25
  $region24: #{tpu_custom_call.1} parent=0 // pred_region
    _
  $region25: #{tpu_custom_call.1} parent=0 // pred_fallthru
    _
  // Predicated region
  $region26: #{tpu_custom_call.1} parent=0 // pred_check
    _
  $region27: #{tpu_custom_call.1} parent=0 // pred_check_branch
    %27 = sbr.rel (0) target = $region29
  $region28: #{tpu_custom_call.1} parent=0 // pred_region
    _
  $region29: #{tpu_custom_call.1} parent=0 // pred_fallthru
    _
  %v29 = vld [vmem:[%s0] sm:$0xf]
  %v30 = vld [vmem:[%s0 + $0x4] sm:$0xf]
  %v31 = vld [vmem:[%s1] sm:$0xf]
  %v32 = vld [vmem:[%s1 + $0x4] sm:$0xf]
  %v33 = vld [vmem:[%s1 + $0x8] sm:$0xf]
  %v34 = vld [vmem:[%s1 + $0xc] sm:$0xf]
  %v35 = vld [vmem:[%s2] sm:$0x1]
  %v37 = vperm.slane %v35, 0
  %v41 = vunpack.c.l.b16 %v29
  %v42 = vunpack.c.l.b16 %v30
  %v43 = vpack.c.b16 %v42, %v41
  %v48 = vunpack.c.l.b16 %v31
  %v49 = vunpack.c.l.b16 %v32
  %v50 = vunpack.c.l.b16 %v33
  %v51 = vunpack.c.l.b16 %v34
  %v52 = vpack.c.b16 %v49, %v48
  %v53 = vpack.c.b16 %v51, %v50
  %vm56 = vcmask 261120
  %v58 = vsel %vm56, %v43, 0
  %60 = vmatpush.bf16.msra.mxu0 0
  %61 = vmatpush.bf16.msra.mxu0 0
  %62 = vmatpush.bf16.msra.mxu0 0
  %63 = vmatpush.bf16.msra.mxu0 0
  %64 = vmatpush.bf16.msra.mxu0 0
  %65 = vmatpush.bf16.msra.mxu0 0
  %66 = vmatpush.bf16.msra.mxu0 %v53
  %67 = vmatpush.bf16.msra.mxu0 %v52
  %68 = vmatmul.bf16.gmra.mxu0 %v58
  %v69 = vpop.f32.mrf.mxu0
  %v70 = vadd.f32 %v37, %v69
  %v71 = vpop.f32.mrf.mxu0
  %v72 = vadd.f32 %v37, %v71
  %73 = vdwg.mxu0
  %vm74 = vcmp.gt.f32.partialorder %v70, 0.0
  %vm75 = vcmp.gt.f32.partialorder %v72, 0.0
  %v76 = vmul.f32 %v70, 0.01
  %v77 = vmul.f32 %v72, 0.01
  %v78 = vsel %vm74, %v70, %v76
  %v79 = vsel %vm75, %v72, %v77
  %v80 = vpack.c.bf16 %v79, %v78
  %v81 = vld [vmem:[%s3] sm:$0xf]
  %v82 = vld [vmem:[%s3 + $0x4] sm:$0xf]
  %v83 = vld [vmem:[%s3 + $0x8] sm:$0xf]
  %v84 = vld [vmem:[%s3 + $0xc] sm:$0xf]
  %v85 = vld [vmem:[%s3 + $0x10] sm:$0xf]
  %v86 = vld [vmem:[%s3 + $0x14] sm:$0xf]
  %v87 = vld [vmem:[%s3 + $0x18] sm:$0x1]
  %v88 = vld [vmem:[%s4] sm:$0x1]
  %v90 = vperm.slane %v88, 0
  %v99 = vunpack.c.l.b16 %v81
  %v100 = vunpack.c.l.b16 %v82
  %v101 = vunpack.c.l.b16 %v83
  %v102 = vunpack.c.l.b16 %v84
  %v103 = vunpack.c.l.b16 %v85
  %v104 = vunpack.c.l.b16 %v86
  %v105 = vunpack.c.l.b16 %v87
  %v106 = vpack.c.b16 %v100, %v99
  %v107 = vpack.c.b16 %v102, %v101
  %v108 = vpack.c.b16 %v104, %v103
  %v109 = vpack.c.b16 %v105, %v105
  %vm113 = vcmask 408576
  %v115 = vsel %vm113, %v80, 0
  %vm117 = vcmask 1040384
  %v119 = vsel %vm117, %v109, 0
  %121 = vmatpush.bf16.msra.mxu0 0
  %122 = vmatpush.bf16.msra.mxu0 0
  %123 = vmatpush.bf16.msra.mxu0 0
  %124 = vmatpush.bf16.msra.mxu0 0
  %125 = vmatpush.bf16.msra.mxu0 %v119
  %126 = vmatpush.bf16.msra.mxu0 %v108
  %127 = vmatpush.bf16.msra.mxu0 %v107
  %128 = vmatpush.bf16.msra.mxu0 %v106
  %129 = vmatmul.bf16.gmra.mxu0 %v115
  %v130 = vpop.f32.mrf.mxu0
  %v131 = vadd.f32 %v90, %v130
  %v132 = vpop.f32.mrf.mxu0
  %v133 = vadd.f32 %v90, %v132
  %134 = vdwg.mxu0
  %vm135 = vcmp.gt.f32.partialorder %v131, 0.0
  %vm136 = vcmp.gt.f32.partialorder %v133, 0.0
  %v137 = vmul.f32 %v131, 0.01
  %v138 = vmul.f32 %v133, 0.01
  %v139 = vsel %vm135, %v131, %v137
  %v140 = vsel %vm136, %v133, %v138
  %v141 = vpack.c.bf16 %v140, %v139
  %v142 = vld [vmem:[%s5] sm:$0xf]
  %v143 = vld [vmem:[%s5 + $0x4] sm:$0xf]
  %v144 = vld [vmem:[%s5 + $0x8] sm:$0xf]
  %v145 = vld [vmem:[%s5 + $0xc] sm:$0xf]
  %v146 = vld [vmem:[%s5 + $0x10] sm:$0xf]
  %v147 = vld [vmem:[%s5 + $0x14] sm:$0xf]
  %v148 = vld [vmem:[%s5 + $0x18] sm:$0xf]
  %v149 = vld [vmem:[%s5 + $0x1c] sm:$0xf]
  %v150 = vld [vmem:[%s5 + $0x20] sm:$0xf]
  %v151 = vld [vmem:[%s5 + $0x24] sm:$0xf]
  %v152 = vld [vmem:[%s5 + $0x28] sm:$0xf]
  %v153 = vld [vmem:[%s5 + $0x2c] sm:$0xf]
  %v154 = vld [vmem:[%s5 + $0x30] sm:$0x3]
  %v155 = vld [vmem:[#allocation2] sm:$0x1]
  %v157 = vperm.slane %v155, 0
  %v172 = vunpack.c.l.b16 %v142
  %v173 = vunpack.c.l.b16 %v143
  %v174 = vunpack.c.l.b16 %v144
  %v175 = vunpack.c.l.b16 %v145
  %v176 = vunpack.c.l.b16 %v146
  %v177 = vunpack.c.l.b16 %v147
  %v178 = vunpack.c.l.b16 %v148
  %v179 = vunpack.c.l.b16 %v149
  %v180 = vunpack.c.l.b16 %v150
  %v181 = vunpack.c.l.b16 %v151
  %v182 = vunpack.c.l.b16 %v152
  %v183 = vunpack.c.l.b16 %v153
  %v184 = vunpack.c.l.b16 %v154
  %v185 = vpack.c.b16 %v173, %v172
  %v186 = vpack.c.b16 %v175, %v174
  %v187 = vpack.c.b16 %v177, %v176
  %v188 = vpack.c.b16 %v179, %v178
  %v189 = vpack.c.b16 %v181, %v180
  %v190 = vpack.c.b16 %v183, %v182
  %v191 = vpack.c.b16 %v184, %v184
  %vm198 = vcmask 818176
  %v200 = vsel %vm198, %v141, 0
  %vm202 = vcmask 1041408
  %v204 = vsel %vm202, %v191, 0
  %206 = vmatpush.bf16.msra.mxu0 0
  %207 = vmatpush.bf16.msra.mxu0 %v204
  %208 = vmatpush.bf16.msra.mxu0 %v190
  %209 = vmatpush.bf16.msra.mxu0 %v189
  %210 = vmatpush.bf16.msra.mxu0 %v188
  %211 = vmatpush.bf16.msra.mxu0 %v187
  %212 = vmatpush.bf16.msra.mxu0 %v186
  %213 = vmatpush.bf16.msra.mxu0 %v185
  %214 = vmatmul.bf16.gmra.mxu0 %v200
  %v215 = vpop.f32.mrf.mxu0
  %v216 = vadd.f32 %v157, %v215
  %v217 = vpop.f32.mrf.mxu0
  %v218 = vadd.f32 %v157, %v217
  %219 = vdwg.mxu0
  %v220 = vsub.f32 0.0, %v216
  %v221 = vsub.f32 0.0, %v218
  %v222 = vmul.f32 %v220, 1.442695
  %v223 = vpow.pop %v222
  %v224 = vmul.f32 %v221, 1.442695
  %v225 = vpow.pop %v224
  %v226 = vadd.f32 %v223, 1.0
  %v227 = vadd.f32 %v225, 1.0
  %v228 = vrcp.pop %v226
  %v229 = vrcp.pop %v227
  %vm230 = vcmask 7168
  %231 = vst.msk [vmem:[%s7] sm:$0xff] %vm230, %v228
  %232 = vst.msk [vmem:[%s7 + $0x8] sm:$0xff] %vm230, %v229
  // Predicated region
  $region30: #{tpu_custom_call.1} parent=0 // pred_check
    _
  $region31: #{tpu_custom_call.1} parent=0 // pred_check_branch
    %234 = sbr.rel (0) target = $region33
  $region32: #{tpu_custom_call.1} parent=0 // pred_region
    _
  $region33: #{tpu_custom_call.1} parent=0 // pred_fallthru
    _
  // Predicated region
  $region34: #{tpu_custom_call.1} parent=0 // pred_check
    _
  $region35: #{tpu_custom_call.1} parent=0 // pred_check_branch
    %236 = sbr.rel (0) target = $region37
  $region36: #{tpu_custom_call.1} parent=0 // pred_region
    _
  $region37: #{tpu_custom_call.1} parent=0 // pred_fallthru
    _

</llo_original>
